<compile_context>
chip_gen: v5e
topology: v5e:2x2
jax: 0.10.0
libtpu: 0.0.40
codegen_flags: <defaults>
</compile_context>

<pallas_src>
import math

import numpy as np
import jax
import jax.numpy as jnp
from jax import lax
from jax.experimental import pallas as pl
from jax.experimental.pallas import tpu as pltpu

_LANE = 128      # TPU vreg lane width
_SUBLANE = 8     # TPU vreg sublane count


def _triple(v):
    if isinstance(v, (tuple, list)):
        assert len(v) == 3
        return tuple(int(x) for x in v)
    return (int(v),) * 3


def _round_up(x, m):
    return -(-x // m) * m


def _plan_tap_reduce(n_vox, width, K, itemsize, budget_bytes=20 * 1024 * 1024):
    """Tiling plan for max-reducing a (K, n_vox, width) tap-major grid over K.

    The array is viewed as (K, rows, 128) with rows * 128 == n_vox_pad * width.
    Returns (n_vox_pad, rows, tile_rows) with rows % tile_rows == 0 and
    tile_rows % 8 == 0, so all blocks are (8,128)-aligned and stores are unmasked.
    """
    rows_needed = _round_up(_round_up(n_vox * width, _LANE) // _LANE, _SUBLANE)
    # Double-buffered (K input + 1 output) rows of 128 lanes per grid step.
    per_row = 2 * (K + 1) * _LANE * itemsize
    tile_rows = max(_SUBLANE, (budget_bytes // per_row) // _SUBLANE * _SUBLANE)
    tile_rows = min(tile_rows, rows_needed)
    block_elems = tile_rows * _LANE
    vox_granule = block_elems // math.gcd(block_elems, width)
    n_vox_pad = _round_up(n_vox, vox_granule)
    rows = (n_vox_pad * width) // _LANE
    assert rows % tile_rows == 0 and rows * _LANE == n_vox_pad * width
    return n_vox_pad, rows, tile_rows


def _make_tap_max_call(K, rows, tile_rows, dtype):
    """pallas_call computing out[r, l] = max_k in[k, r, l] over a (K, rows, 128) array."""

    def kernel(x_ref, o_ref):
        acc = x_ref[0]                       # init from tap 0: no fill / extra vmax
        for t in range(1, K):                # small static unroll, pure VPU max
            acc = jnp.maximum(acc, x_ref[t])
        o_ref[...] = acc

    return pl.pallas_call(
        kernel,
        out_shape=jax.ShapeDtypeStruct((rows, _LANE), dtype),
        grid_spec=pltpu.PrefetchScalarGridSpec(
            num_scalar_prefetch=0,
            grid=(rows // tile_rows,),
            in_specs=[pl.BlockSpec((K, tile_rows, _LANE), lambda i: (0, i, 0))],
            out_specs=pl.BlockSpec((tile_rows, _LANE), lambda i: (i, 0)),
        ),
        compiler_params=pltpu.CompilerParams(
            dimension_semantics=("parallel",),
            vmem_limit_bytes=32 * 1024 * 1024),
    )


class MaxPool3DWrapPallas:
    """JAX/Pallas equivalent of MaxPool3DWrap (SparseMaxPool3d on a SparseTensor)."""

    def __init__(self, kernel_size, stride):
        self.kernel_size = _triple(kernel_size)
        self.stride = _triple(stride)
        if self.kernel_size != self.stride:
            # TODO(synk): overlapping pooling windows (stride != kernel_size) are not
            # implemented in the Pallas fast path; PartA2 uses kernel=stride=2.
            raise NotImplementedError("Pallas path requires kernel_size == stride")

    def __call__(self, feats, coords, spatial_range):
        """
        feats:  [N, C] float32
        coords: [N, 4] int32, columns (batch, z, y, x)
        spatial_range: (B, D, H, W)
        returns (out_feats [M, C], out_coords [M, 4], out_spatial_range,
                 pooled_dense [B, Do, Ho, Wo, C], pooled_mask [B, Do, Ho, Wo])
        """
        B, D, H, W = (int(s) for s in spatial_range)
        C = int(feats.shape[1])
        kd, kh, kw = self.kernel_size
        Do, Ho, Wo = D // kd, H // kh, W // kw
        assert Do > 0 and Ho > 0 and Wo > 0, "pooling window larger than input"
        K = kd * kh * kw
        dtype = feats.dtype
        itemsize = np.dtype(dtype).itemsize
        n_vox = B * Do * Ho * Wo

        # --- densify (glue) directly into tap-major, voxel-flat layout -------------
        # TODO(synk): spconv's hash-table indice generation has no clean Pallas
        # equivalent; densify is a jnp scatter (duplicate coords: unspecified winner).
        b = coords[:, 0]
        z, y, x = coords[:, 1], coords[:, 2], coords[:, 3]
        do, dz = z // kd, z % kd
        ho, dy = y // kh, y % kh
        wo, dx = x // kw, x % kw
        tap = (dz * kh + dy) * kw + dx
        voxflat = ((b * Do + do) * Ho + ho) * Wo + wo
        # Inputs past the pooled coverage (do >= Do etc.) are dropped (VALID pooling).
        valid = (b >= 0) & (b < B) & (do < Do) & (ho < Ho) & (wo < Wo)

        nvp_f, rows_f, trows_f = _plan_tap_reduce(n_vox, C, K, itemsize)
        nvp_m, rows_m, trows_m = _plan_tap_reduce(n_vox, 1, K, itemsize)
        vox_f = jnp.where(valid, voxflat, nvp_f)   # OOB sentinel -> dropped
        vox_m = jnp.where(valid, voxflat, nvp_m)

        xr = jnp.full((K, nvp_f, C), -jnp.inf, dtype=dtype)
        xr = xr.at[tap, vox_f].set(feats, mode="drop")
        xr = xr.reshape(K, rows_f, _LANE)          # free reshape, lane-dense blocks
        mr = jnp.zeros((K, nvp_m), dtype=dtype)
        mr = mr.at[tap, vox_m].set(1.0, mode="drop")
        mr = mr.reshape(K, rows_m, _LANE)

        # --- hot path: Pallas max-reduce over the tap axis -------------------------
        pooled_rows = _make_tap_max_call(K, rows_f, trows_f, dtype)(xr)
        mask_rows = _make_tap_max_call(K, rows_m, trows_m, dtype)(mr)

        pooled = pooled_rows.reshape(-1)[: n_vox * C].reshape(B, Do, Ho, Wo, C)
        pooled_m = mask_rows.reshape(-1)[: n_vox].reshape(B, Do, Ho, Wo)

        # --- re-sparsify on device: only the active count goes to the host --------
        active_flat = (pooled_m > 0.5).reshape(-1)
        num_active = int(jnp.sum(active_flat))           # single scalar host sync
        idx = jnp.nonzero(active_flat, size=num_active, fill_value=0)[0]
        b_o = idx // (Do * Ho * Wo)
        rem = idx % (Do * Ho * Wo)
        z_o = rem // (Ho * Wo)
        rem2 = rem % (Ho * Wo)
        y_o = rem2 // Wo
        x_o = rem2 % Wo
        out_coords = jnp.stack([b_o, z_o, y_o, x_o], axis=1).astype(jnp.int32)
        out_feats = pooled.reshape(-1, C)[idx]
        # NOTE: row-major (b, z, y, x) order; spconv's hash-table indice order differs.

        out_spatial_range = (B, Do, Ho, Wo)
        return out_feats, out_coords, out_spatial_range, pooled, pooled_m


def _reference_dense_pool(dense, kernel_size, stride):
    return lax.reduce_window(
        dense, -jnp.inf, lax.max,
        window_dimensions=(1,) + tuple(kernel_size) + (1,),
        window_strides=(1,) + tuple(stride) + (1,),
        padding="VALID")


if __name__ == "__main__":
    key = jax.random.PRNGKey(0)

    # Small sparse-tensor problem consistent with PartA2 RoI grids.
    B, D, H, W, C = 2, 8, 8, 8, 32
    kernel_size, stride = 2, 2
    pts_per_batch = 40

    # Deterministic, collision-free sparse coordinates per batch.
    coords_list, feats_list = [], []
    k_feat = key
    for bb in range(B):
        k_feat, k_sel, k_val = jax.random.split(k_feat, 3)
        lin = jax.random.choice(k_sel, D * H * W, shape=(pts_per_batch,),
                                replace=False)
        z, rem = lin // (H * W), lin % (H * W)
        y, x = rem // W, rem % W
        c = jnp.stack([jnp.full_like(z, bb), z, y, x], axis=1).astype(jnp.int32)
        f = jax.random.normal(k_val, (pts_per_batch, C), dtype=jnp.float32)
        coords_list.append(c)
        feats_list.append(f)
    coords = jnp.concatenate(coords_list, axis=0)   # [N, 4]
    feats = jnp.concatenate(feats_list, axis=0)     # [N, C]
    spatial_range = (B, D, H, W)

    module = MaxPool3DWrapPallas(kernel_size, stride)
    out_feats, out_coords, out_range, pooled, pooled_mask = module(
        feats, coords, spatial_range)
    jax.block_until_ready((out_feats, out_coords, pooled, pooled_mask))

    # Reference: dense max-pool via XLA reduce_window on the original layout.
    dense = jnp.full((B, D, H, W, C), -jnp.inf, dtype=feats.dtype)
    dense = dense.at[coords[:, 0], coords[:, 1],
                     coords[:, 2], coords[:, 3]].set(feats)
    ref = _reference_dense_pool(dense, module.kernel_size, module.stride)

    occ = jnp.zeros((B, D, H, W), dtype=feats.dtype)
    occ = occ.at[coords[:, 0], coords[:, 1], coords[:, 2], coords[:, 3]].set(1.0)
    ref_mask = lax.reduce_window(
        occ, 0.0, lax.max,
        window_dimensions=(1,) + module.kernel_size,
        window_strides=(1,) + module.stride,
        padding="VALID")

    np.testing.assert_allclose(np.asarray(pooled), np.asarray(ref),
                               rtol=1e-6, atol=1e-6)
    np.testing.assert_array_equal(np.asarray(pooled_mask > 0.5),
                                  np.asarray(ref_mask > 0.5))

    # Sparse outputs must match the active voxels of the reference dense pool.
    ref_np = np.asarray(ref)
    mask_np = np.asarray(ref_mask) > 0.5
    exp_coords = np.argwhere(mask_np).astype(np.int32)
    exp_feats = ref_np[mask_np]
    np.testing.assert_array_equal(np.asarray(out_coords), exp_coords)
    np.testing.assert_allclose(np.asarray(out_feats), exp_feats,
                               rtol=1e-6, atol=1e-6)

    assert out_feats.shape[0] == out_coords.shape[0]
    assert out_range == (B, D // 2, H // 2, W // 2)

    print("KERNEL_OK")
</pallas_src>

<mosaic_0001>
module attributes {stable_mosaic.version = 11 : i64} {
  func.func @kernel(%arg0: i32, %arg1: memref<8x32x128xf32, #tpu.memory_space<vmem>>, %arg2: memref<32x128xf32, #tpu.memory_space<vmem>>) attributes {dimension_semantics = [#tpu.dimension_semantics<parallel>], iteration_bounds = array<i64: 1>, scalar_prefetch = 0 : i64, scratch_operands = 0 : i64, tpu.core_type = #tpu.core_type<tc>, window_params = [{transform_indices = @transform_0, window_bounds = array<i64: 8, 32, 128>}, {transform_indices = @transform_1, window_bounds = array<i64: 32, 128>}]} {
    %c0 = arith.constant 0 : index
    %c0_0 = arith.constant 0 : index
    %c0_1 = arith.constant 0 : index
    %0 = vector.load %arg1[%c0, %c0_0, %c0_1] : memref<8x32x128xf32, #tpu.memory_space<vmem>>, vector<1x32x128xf32>
    %1 = vector.shape_cast %0 : vector<1x32x128xf32> to vector<32x128xf32>
    %c1 = arith.constant 1 : index
    %c0_2 = arith.constant 0 : index
    %c0_3 = arith.constant 0 : index
    %2 = vector.load %arg1[%c1, %c0_2, %c0_3] : memref<8x32x128xf32, #tpu.memory_space<vmem>>, vector<1x32x128xf32>
    %3 = vector.shape_cast %2 : vector<1x32x128xf32> to vector<32x128xf32>
    %4 = arith.maximumf %1, %3 : vector<32x128xf32>
    %c2 = arith.constant 2 : index
    %c0_4 = arith.constant 0 : index
    %c0_5 = arith.constant 0 : index
    %5 = vector.load %arg1[%c2, %c0_4, %c0_5] : memref<8x32x128xf32, #tpu.memory_space<vmem>>, vector<1x32x128xf32>
    %6 = vector.shape_cast %5 : vector<1x32x128xf32> to vector<32x128xf32>
    %7 = arith.maximumf %4, %6 : vector<32x128xf32>
    %c3 = arith.constant 3 : index
    %c0_6 = arith.constant 0 : index
    %c0_7 = arith.constant 0 : index
    %8 = vector.load %arg1[%c3, %c0_6, %c0_7] : memref<8x32x128xf32, #tpu.memory_space<vmem>>, vector<1x32x128xf32>
    %9 = vector.shape_cast %8 : vector<1x32x128xf32> to vector<32x128xf32>
    %10 = arith.maximumf %7, %9 : vector<32x128xf32>
    %c4 = arith.constant 4 : index
    %c0_8 = arith.constant 0 : index
    %c0_9 = arith.constant 0 : index
    %11 = vector.load %arg1[%c4, %c0_8, %c0_9] : memref<8x32x128xf32, #tpu.memory_space<vmem>>, vector<1x32x128xf32>
    %12 = vector.shape_cast %11 : vector<1x32x128xf32> to vector<32x128xf32>
    %13 = arith.maximumf %10, %12 : vector<32x128xf32>
    %c5 = arith.constant 5 : index
    %c0_10 = arith.constant 0 : index
    %c0_11 = arith.constant 0 : index
    %14 = vector.load %arg1[%c5, %c0_10, %c0_11] : memref<8x32x128xf32, #tpu.memory_space<vmem>>, vector<1x32x128xf32>
    %15 = vector.shape_cast %14 : vector<1x32x128xf32> to vector<32x128xf32>
    %16 = arith.maximumf %13, %15 : vector<32x128xf32>
    %c6 = arith.constant 6 : index
    %c0_12 = arith.constant 0 : index
    %c0_13 = arith.constant 0 : index
    %17 = vector.load %arg1[%c6, %c0_12, %c0_13] : memref<8x32x128xf32, #tpu.memory_space<vmem>>, vector<1x32x128xf32>
    %18 = vector.shape_cast %17 : vector<1x32x128xf32> to vector<32x128xf32>
    %19 = arith.maximumf %16, %18 : vector<32x128xf32>
    %c7 = arith.constant 7 : index
    %c0_14 = arith.constant 0 : index
    %c0_15 = arith.constant 0 : index
    %20 = vector.load %arg1[%c7, %c0_14, %c0_15] : memref<8x32x128xf32, #tpu.memory_space<vmem>>, vector<1x32x128xf32>
    %21 = vector.shape_cast %20 : vector<1x32x128xf32> to vector<32x128xf32>
    %22 = arith.maximumf %19, %21 : vector<32x128xf32>
    %c0_16 = arith.constant 0 : index
    %c0_17 = arith.constant 0 : index
    %23 = vector.load %arg2[%c0_16, %c0_17] : memref<32x128xf32, #tpu.memory_space<vmem>>, vector<32x128xf32>
    tpu.vector_store %arg2[%c0_16, %c0_17], %22 {strides = array<i32>} : memref<32x128xf32, #tpu.memory_space<vmem>>, vector<32x128xf32>,
    return
  }
  func.func @transform_0(%arg0: i32) -> (i32, i32, i32) {
    %c0_i32 = arith.constant 0 : i32
    %c0_i32_0 = arith.constant 0 : i32
    %c0_i32_1 = arith.constant 0 : i32
    return %c0_i32, %arg0, %c0_i32_0 : i32, i32, i32
  }
  func.func @transform_1(%arg0: i32) -> (i32, i32) {
    %c0_i32 = arith.constant 0 : i32
    %c0_i32_0 = arith.constant 0 : i32
    return %arg0, %c0_i32 : i32, i32
  }
}

</mosaic_0001>

<llo_original>
// kernel: tpu_custom_call.1
$region0: #{tpu_custom_call.1}
  #allocation0 [shape = 'u32[]', space=smem, size = 0x4, offset = 0x4, fixed_abs, tag = 'smem constant byte address 0x4 - core index']
  #allocation1 [shape = 'u32[72,128]{1,0:T(1,128)}', space=vmem, size = 0x9000, scoped, tag = 'internal scratch']
  %s0 = inlined_call_operand.hbm [shape: f32[8,32,128], index: 0, kind: input, shape index: {}]
  %s1 = inlined_call_operand.hbm [shape: f32[32,128], index: 1, kind: output, shape index: {}]
  %s2 = sld [smem:[#allocation0]]
  $region18: #{tpu_custom_call.1} parent=0
    _
  %s4 = ssub.s32 1, %s2
  %s5 = scalar_select 0, %s4, %s2
  $region1: #{tpu_custom_call.1} parent=0
    #allocation2 [shape = 'u8[131072]{0}', space=vmem, size = 0x20000, scoped, tag = 'input window, operand 0, single buffered']
    #allocation3 [shape = 's32[1]{0}', space=sflag, size = 0x4, scoped, tag = 'scoped memory for tpu_custom_call.1']
    #allocation4 [shape = 's32[1]{0}', space=sflag, size = 0x4, scoped, tag = 'scoped memory for tpu_custom_call.1']
    #allocation5 [shape = 'u8[16384]{0}', space=vmem, size = 0x4000, scoped, tag = 'output window, operand 0, single buffered']
    %6 = vsyncpa [#allocation3], 0
    %7 = vsyncpa [#allocation4], 0
    // Predicated region
    $region2: #{tpu_custom_call.1} parent=1 // pred_check
      _
    $region3: #{tpu_custom_call.1} parent=1 // pred_check_branch
      %9 = sbr.rel (0) target = $region5
    $region4: #{tpu_custom_call.1} parent=1 // pred_region
      %11 = vsyncadd [#allocation3], 0
      %s12 = sshll.u32 %s0, 4
      %s13 = int_to_ptr.hbm [resolvable:$true] %s12
      %s14 = sshll.u32 [#allocation2], 4
      %s15 = int_to_ptr.vmem [resolvable:$true] %s14
      %20 = dma.hbm_to_vmem [thread:$0]  %s13, 4096, %s15, [#allocation3], 128, 128, 8
    $region5: #{tpu_custom_call.1} parent=1 // pred_fallthru
      _
    // Predicated region
    $region6: #{tpu_custom_call.1} parent=1 // pred_check
      _
    $region7: #{tpu_custom_call.1} parent=1 // pred_check_branch
      %22 = sbr.rel (0) target = $region9
    $region8: #{tpu_custom_call.1} parent=1 // pred_region
      %24 = dma.done [#allocation3], 4096
    $region9: #{tpu_custom_call.1} parent=1 // pred_fallthru
      _
    %v25 = vld [vmem:[#allocation2] sm:$0xff]
    %v26 = vld [vmem:[#allocation2 + $0x8] sm:$0xff]
    %v27 = vld [vmem:[#allocation2 + $0x10] sm:$0xff]
    %v28 = vld [vmem:[#allocation2 + $0x18] sm:$0xff]
    %s29 = scalar_lea.vmem [#allocation2], 32
    %v30 = vld [vmem:[%s29] sm:$0xff]
    %v31 = vld [vmem:[%s29 + $0x8] sm:$0xff]
    %v32 = vld [vmem:[%s29 + $0x10] sm:$0xff]
    %v33 = vld [vmem:[%s29 + $0x18] sm:$0xff]
    %v34 = vmax.f32 %v25, %v30
    %v35 = vmax.f32 %v26, %v31
    %v36 = vmax.f32 %v27, %v32
    %v37 = vmax.f32 %v28, %v33
    %s38 = scalar_lea.vmem [#allocation2], 64
    %v39 = vld [vmem:[%s38] sm:$0xff]
    %v40 = vld [vmem:[%s38 + $0x8] sm:$0xff]
    %v41 = vld [vmem:[%s38 + $0x10] sm:$0xff]
    %v42 = vld [vmem:[%s38 + $0x18] sm:$0xff]
    %v43 = vmax.f32 %v34, %v39
    %v44 = vmax.f32 %v35, %v40
    %v45 = vmax.f32 %v36, %v41
    %v46 = vmax.f32 %v37, %v42
    %s47 = scalar_lea.vmem [#allocation2], 96
    %v48 = vld [vmem:[%s47] sm:$0xff]
    %v49 = vld [vmem:[%s47 + $0x8] sm:$0xff]
    %v50 = vld [vmem:[%s47 + $0x10] sm:$0xff]
    %v51 = vld [vmem:[%s47 + $0x18] sm:$0xff]
    %v52 = vmax.f32 %v43, %v48
    %v53 = vmax.f32 %v44, %v49
    %v54 = vmax.f32 %v45, %v50
    %v55 = vmax.f32 %v46, %v51
    %s56 = scalar_lea.vmem [#allocation2], 128
    %v57 = vld [vmem:[%s56] sm:$0xff]
    %v58 = vld [vmem:[%s56 + $0x8] sm:$0xff]
    %v59 = vld [vmem:[%s56 + $0x10] sm:$0xff]
    %v60 = vld [vmem:[%s56 + $0x18] sm:$0xff]
    %v61 = vmax.f32 %v52, %v57
    %v62 = vmax.f32 %v53, %v58
    %v63 = vmax.f32 %v54, %v59
    %v64 = vmax.f32 %v55, %v60
    %s65 = scalar_lea.vmem [#allocation2], 160
    %v66 = vld [vmem:[%s65] sm:$0xff]
    %v67 = vld [vmem:[%s65 + $0x8] sm:$0xff]
    %v68 = vld [vmem:[%s65 + $0x10] sm:$0xff]
    %v69 = vld [vmem:[%s65 + $0x18] sm:$0xff]
    %v70 = vmax.f32 %v61, %v66
    %v71 = vmax.f32 %v62, %v67
    %v72 = vmax.f32 %v63, %v68
    %v73 = vmax.f32 %v64, %v69
    %s74 = scalar_lea.vmem [#allocation2], 192
    %v75 = vld [vmem:[%s74] sm:$0xff]
    %v76 = vld [vmem:[%s74 + $0x8] sm:$0xff]
    %v77 = vld [vmem:[%s74 + $0x10] sm:$0xff]
    %v78 = vld [vmem:[%s74 + $0x18] sm:$0xff]
    %v79 = vmax.f32 %v70, %v75
    %v80 = vmax.f32 %v71, %v76
    %v81 = vmax.f32 %v72, %v77
    %v82 = vmax.f32 %v73, %v78
    %s83 = scalar_lea.vmem [#allocation2], 224
    %v84 = vld [vmem:[%s83] sm:$0xff]
    %v85 = vld [vmem:[%s83 + $0x8] sm:$0xff]
    %v86 = vld [vmem:[%s83 + $0x10] sm:$0xff]
    %v87 = vld [vmem:[%s83 + $0x18] sm:$0xff]
    %v88 = vmax.f32 %v79, %v84
    %v89 = vmax.f32 %v80, %v85
    %v90 = vmax.f32 %v81, %v86
    %v91 = vmax.f32 %v82, %v87
    %92 = vst [vmem:[#allocation5] sm:$0xff] %v88
    %93 = vst [vmem:[#allocation5 + $0x8] sm:$0xff] %v89
    %94 = vst [vmem:[#allocation5 + $0x10] sm:$0xff] %v90
    %95 = vst [vmem:[#allocation5 + $0x18] sm:$0xff] %v91
    // Predicated region
    $region10: #{tpu_custom_call.1} parent=1 // pred_check
      _
    $region11: #{tpu_custom_call.1} parent=1 // pred_check_branch
      %97 = sbr.rel (0) target = $region13
    $region12: #{tpu_custom_call.1} parent=1 // pred_region
      %99 = vsyncadd [#allocation4], 0
      %s100 = sshll.u32 [#allocation5], 4
      %s101 = int_to_ptr.vmem [resolvable:$true] %s100
      %s102 = sshll.u32 %s1, 4
      %s103 = int_to_ptr.hbm [resolvable:$true] %s102
      %108 = dma.vmem_to_hbm [thread:$0]  %s101, 512, %s103, [#allocation4], 128, 128, 8
    $region13: #{tpu_custom_call.1} parent=1 // pred_fallthru
      _
    // Predicated region
    $region14: #{tpu_custom_call.1} parent=1 // pred_check
      _
    $region15: #{tpu_custom_call.1} parent=1 // pred_check_branch
      %110 = sbr.rel (0) target = $region17
    $region16: #{tpu_custom_call.1} parent=1 // pred_region
      %112 = dma.done [#allocation4], 512
    $region17: #{tpu_custom_call.1} parent=1 // pred_fallthru
      _
    %113 = vsyncpa [#allocation3], 1
    %114 = vsyncpa [#allocation4], 1

</llo_original>
